<compile_context>
chip_gen: v7x
topology: tpu7x:2x2x1
jax: 0.10.0
libtpu: 0.0.40
codegen_flags: <defaults>
</compile_context>

<pallas_src>
import jax
import jax.numpy as jnp
from jax.experimental import pallas as pl
from jax.experimental.pallas import tpu as pltpu


# ---------------------------------------------------------------------------
# Fused kernel: synthetic inner model (x-path) for both halves + CFG combine.
#   h_c        = c_in(sigma[b]) * sum_k x[b, k, :] * wx[k, c]        (VPU FMAs)
#   un         = h_c + cfeat_uncond[b, c]
#   co         = h_c + cfeat_cond[b, c]
#   out[b, c]  = un + (co - un) * cond_scale
# ---------------------------------------------------------------------------
def cfg_denoiser_kernel(sigma_ref, scale_ref, wx_ref, cf_un_ref, cf_co_ref,
                        x_ref, o_ref):
    b = pl.program_id(0)
    C = x_ref.shape[1]                      # static channel count from block shape

    sigma = sigma_ref[b]                    # scalar from SMEM
    c_in = 1.0 / jnp.sqrt(sigma * sigma + 1.0)
    scale = scale_ref[0]                    # cond_scale scalar from SMEM

    # Load each input-channel row once: (1, hw_tile) with HW on the lane axis.
    xrows = [x_ref[0, k:k + 1, :] for k in range(C)]

    for c in range(C):
        # 1x1 channel mix on the VPU (weights are SMEM scalars).
        acc = xrows[0] * wx_ref[0 * C + c]
        for k in range(1, C):
            acc = acc + xrows[k] * wx_ref[k * C + c]
        h_c = acc * c_in                    # (1, hw_tile)

        # The doubled-batch halves differ only in the conditioning term.
        un = h_c + cf_un_ref[b * C + c]
        co = h_c + cf_co_ref[b * C + c]

        # CFG combine -- the actual CFGDenoiser math.
        o_ref[0, c:c + 1, :] = un + (co - un) * scale


def _pick_hw_tile(HW, max_tile=2048):
    """Largest HW tile <= max_tile that keeps the (., 128) lane constraint."""
    if HW <= max_tile:
        return HW
    t = (max_tile // 128) * 128
    while t >= 128:
        if HW % t == 0:
            return t
        t -= 128
    return HW


# ---------------------------------------------------------------------------
# Wrapper.  Layout: x is NCHW [B, C, H, W]; (B, C, HW) is a free reshape.
# The conditioning projection (tiny (B, C)) is hoisted to plain JAX.
# ---------------------------------------------------------------------------
@jax.jit
def cfg_denoiser_forward(x, sigma, uncond, cond, cond_scale, wx, wc, bias):
    B, C, H, W = x.shape
    HW = H * W
    hw_tile = _pick_hw_tile(HW)
    n_hw = HW // hw_tile

    # Lane-dense, transpose-free layout.
    x_r = x.reshape(B, C, HW)

    # Hoisted conditioning projection of the synthetic inner model: (B, C) each.
    cf_un = jnp.mean(uncond, axis=1) @ wc + bias            # (B, C)
    cf_co = jnp.mean(cond, axis=1) @ wc + bias              # (B, C)

    scale_arr = jnp.asarray(cond_scale, jnp.float32).reshape(1)
    wx_flat = wx.reshape(C * C).astype(jnp.float32)         # wx_flat[k*C + c] = wx[k, c]
    cf_un_flat = cf_un.reshape(B * C).astype(jnp.float32)
    cf_co_flat = cf_co.reshape(B * C).astype(jnp.float32)

    out_r = pl.pallas_call(
        cfg_denoiser_kernel,
        out_shape=jax.ShapeDtypeStruct((B, C, HW), jnp.float32),
        grid=(B, n_hw),
        in_specs=[
            pl.BlockSpec(memory_space=pltpu.MemorySpace.SMEM),   # sigma      (B,)
            pl.BlockSpec(memory_space=pltpu.MemorySpace.SMEM),   # cond_scale (1,)
            pl.BlockSpec(memory_space=pltpu.MemorySpace.SMEM),   # wx_flat    (C*C,)
            pl.BlockSpec(memory_space=pltpu.MemorySpace.SMEM),   # cf_un_flat (B*C,)
            pl.BlockSpec(memory_space=pltpu.MemorySpace.SMEM),   # cf_co_flat (B*C,)
            pl.BlockSpec((1, C, hw_tile), lambda b, t: (b, 0, t)),   # x (B, C, HW)
        ],
        out_specs=pl.BlockSpec((1, C, hw_tile), lambda b, t: (b, 0, t)),
        compiler_params=pltpu.CompilerParams(
            dimension_semantics=("parallel", "parallel"),
            vmem_limit_bytes=32 * 1024 * 1024),
    )(sigma, scale_arr, wx_flat, cf_un_flat, cf_co_flat, x_r)

    # (B, C, HW) -> NCHW, free reshape.
    return out_r.reshape(B, C, H, W)


# ---------------------------------------------------------------------------
# Pure-JAX reference following the original cat / inner / chunk / combine form.
# ---------------------------------------------------------------------------
def reference_forward(x, sigma, uncond, cond, cond_scale, wx, wc, bias):
    B, C, H, W = x.shape

    def inner(x_in, sigma_in, cond_in):
        c_in = 1.0 / jnp.sqrt(sigma_in * sigma_in + 1.0)            # (2B,)
        xp = jnp.transpose(x_in, (0, 2, 3, 1)).reshape(x_in.shape[0], H * W, C)
        h = jnp.einsum("bpc,cd->bpd", xp * c_in[:, None, None], wx)
        cf = jnp.mean(cond_in, axis=1) @ wc                         # (2B, C)
        return h + cf[:, None, :] + bias[None, :, :]

    x_in = jnp.concatenate([x, x], axis=0)
    sigma_in = jnp.concatenate([sigma, sigma], axis=0)
    cond_in = jnp.concatenate([uncond, cond], axis=0)
    den = inner(x_in, sigma_in, cond_in)                            # (2B, HW, C)
    un, co = den[:B], den[B:]
    out = un + (co - un) * cond_scale
    return jnp.transpose(out.reshape(B, H, W, C), (0, 3, 1, 2))


if __name__ == "__main__":
    B, C, H, W = 2, 4, 16, 16       # latent NCHW
    S, D = 8, 32                    # conditioning: seq len, embed dim
    cond_scale = 7.5

    key = jax.random.PRNGKey(0)
    kx, ks, ku, kc, kw1, kw2, kb = jax.random.split(key, 7)

    x = jax.random.normal(kx, (B, C, H, W), jnp.float32)
    sigma = jax.random.uniform(ks, (B,), jnp.float32, 0.5, 2.0)
    uncond = jax.random.normal(ku, (B, S, D), jnp.float32)
    cond = jax.random.normal(kc, (B, S, D), jnp.float32)

    # Deterministic synthetic inner-model parameters.
    # TODO(synk): the real inner_model is an arbitrary external UNet; it is
    # replaced by this deterministic synthetic denoiser.
    wx = jax.random.normal(kw1, (C, C), jnp.float32) * 0.1 + jnp.eye(C, dtype=jnp.float32)
    wc = jax.random.normal(kw2, (D, C), jnp.float32) * 0.1
    bias = jax.random.normal(kb, (1, C), jnp.float32) * 0.01

    out = cfg_denoiser_forward(x, sigma, uncond, cond, cond_scale, wx, wc, bias)
    out = jax.block_until_ready(out)

    ref = reference_forward(x, sigma, uncond, cond, cond_scale, wx, wc, bias)
    assert out.shape == (B, C, H, W)
    assert jnp.allclose(out, ref, rtol=1e-3, atol=1e-3), "mismatch vs reference"

    print("KERNEL_OK")
</pallas_src>

<mosaic_0001>
module attributes {stable_mosaic.version = 11 : i64} {
  func.func @cfg_denoiser_kernel(%arg0: i32, %arg1: i32, %arg2: memref<2xf32, #tpu.memory_space<smem>>, %arg3: memref<1xf32, #tpu.memory_space<smem>>, %arg4: memref<16xf32, #tpu.memory_space<smem>>, %arg5: memref<8xf32, #tpu.memory_space<smem>>, %arg6: memref<8xf32, #tpu.memory_space<smem>>, %arg7: memref<1x4x256xf32, #tpu.memory_space<vmem>>, %arg8: memref<1x4x256xf32, #tpu.memory_space<vmem>>) attributes {dimension_semantics = [#tpu.dimension_semantics<parallel>, #tpu.dimension_semantics<parallel>], iteration_bounds = array<i64: 2, 1>, scalar_prefetch = 0 : i64, scratch_operands = 0 : i64, tpu.core_type = #tpu.core_type<tc>, window_params = [{transform_indices = @transform_0, window_bounds = array<i64: 2>}, {transform_indices = @transform_1, window_bounds = array<i64: 1>}, {transform_indices = @transform_2, window_bounds = array<i64: 16>}, {transform_indices = @transform_3, window_bounds = array<i64: 8>}, {transform_indices = @transform_4, window_bounds = array<i64: 8>}, {transform_indices = @transform_5, window_bounds = array<i64: 1, 4, 256>}, {transform_indices = @transform_6, window_bounds = array<i64: 1, 4, 256>}]} {
    %0 = arith.index_cast %arg0 : i32 to index
    %1 = memref.load %arg2[%0] : memref<2xf32, #tpu.memory_space<smem>>
    %2 = arith.mulf %1, %1 : f32
    %cst = arith.constant 1.000000e+00 : f32
    %3 = arith.addf %2, %cst : f32
    %4 = math.sqrt %3 : f32
    %cst_0 = arith.constant 1.000000e+00 : f32
    %5 = arith.divf %cst_0, %4 : f32
    %c0 = arith.constant 0 : index
    %6 = memref.load %arg3[%c0] : memref<1xf32, #tpu.memory_space<smem>>
    %c0_1 = arith.constant 0 : index
    %c0_2 = arith.constant 0 : index
    %c0_3 = arith.constant 0 : index
    %7 = vector.load %arg7[%c0_1, %c0_2, %c0_3] : memref<1x4x256xf32, #tpu.memory_space<vmem>>, vector<1x1x256xf32>
    %8 = vector.shape_cast %7 : vector<1x1x256xf32> to vector<1x256xf32>
    %c0_4 = arith.constant 0 : index
    %c1 = arith.constant 1 : index
    %c0_5 = arith.constant 0 : index
    %9 = vector.load %arg7[%c0_4, %c1, %c0_5] : memref<1x4x256xf32, #tpu.memory_space<vmem>>, vector<1x1x256xf32>
    %10 = vector.shape_cast %9 : vector<1x1x256xf32> to vector<1x256xf32>
    %c0_6 = arith.constant 0 : index
    %c2 = arith.constant 2 : index
    %c0_7 = arith.constant 0 : index
    %11 = vector.load %arg7[%c0_6, %c2, %c0_7] : memref<1x4x256xf32, #tpu.memory_space<vmem>>, vector<1x1x256xf32>
    %12 = vector.shape_cast %11 : vector<1x1x256xf32> to vector<1x256xf32>
    %c0_8 = arith.constant 0 : index
    %c3 = arith.constant 3 : index
    %c0_9 = arith.constant 0 : index
    %13 = vector.load %arg7[%c0_8, %c3, %c0_9] : memref<1x4x256xf32, #tpu.memory_space<vmem>>, vector<1x1x256xf32>
    %14 = vector.shape_cast %13 : vector<1x1x256xf32> to vector<1x256xf32>
    %c0_10 = arith.constant 0 : index
    %15 = memref.load %arg4[%c0_10] : memref<16xf32, #tpu.memory_space<smem>>
    %16 = vector.broadcast %15 : f32 to vector<1x256xf32>
    %17 = arith.mulf %8, %16 : vector<1x256xf32>
    %c4 = arith.constant 4 : index
    %18 = memref.load %arg4[%c4] : memref<16xf32, #tpu.memory_space<smem>>
    %19 = vector.broadcast %18 : f32 to vector<1x256xf32>
    %20 = arith.mulf %10, %19 : vector<1x256xf32>
    %21 = arith.addf %17, %20 : vector<1x256xf32>
    %c8 = arith.constant 8 : index
    %22 = memref.load %arg4[%c8] : memref<16xf32, #tpu.memory_space<smem>>
    %23 = vector.broadcast %22 : f32 to vector<1x256xf32>
    %24 = arith.mulf %12, %23 : vector<1x256xf32>
    %25 = arith.addf %21, %24 : vector<1x256xf32>
    %c12 = arith.constant 12 : index
    %26 = memref.load %arg4[%c12] : memref<16xf32, #tpu.memory_space<smem>>
    %27 = vector.broadcast %26 : f32 to vector<1x256xf32>
    %28 = arith.mulf %14, %27 : vector<1x256xf32>
    %29 = arith.addf %25, %28 : vector<1x256xf32>
    %30 = vector.broadcast %5 : f32 to vector<1x256xf32>
    %31 = arith.mulf %29, %30 : vector<1x256xf32>
    %c4_i32 = arith.constant 4 : i32
    %32 = arith.muli %arg0, %c4_i32 : i32
    %c0_i32 = arith.constant 0 : i32
    %33 = arith.addi %32, %c0_i32 : i32
    %34 = arith.index_cast %33 : i32 to index
    %35 = memref.load %arg5[%34] : memref<8xf32, #tpu.memory_space<smem>>
    %36 = vector.broadcast %35 : f32 to vector<1x256xf32>
    %37 = arith.addf %31, %36 : vector<1x256xf32>
    %c4_i32_11 = arith.constant 4 : i32
    %38 = arith.muli %arg0, %c4_i32_11 : i32
    %c0_i32_12 = arith.constant 0 : i32
    %39 = arith.addi %38, %c0_i32_12 : i32
    %40 = arith.index_cast %39 : i32 to index
    %41 = memref.load %arg6[%40] : memref<8xf32, #tpu.memory_space<smem>>
    %42 = vector.broadcast %41 : f32 to vector<1x256xf32>
    %43 = arith.addf %31, %42 : vector<1x256xf32>
    %44 = arith.subf %43, %37 : vector<1x256xf32>
    %45 = vector.broadcast %6 : f32 to vector<1x256xf32>
    %46 = arith.mulf %44, %45 : vector<1x256xf32>
    %47 = arith.addf %37, %46 : vector<1x256xf32>
    %c0_13 = arith.constant 0 : index
    %c0_14 = arith.constant 0 : index
    %c0_15 = arith.constant 0 : index
    %48 = vector.load %arg8[%c0_13, %c0_14, %c0_15] : memref<1x4x256xf32, #tpu.memory_space<vmem>>, vector<1x1x256xf32>
    %49 = vector.shape_cast %48 : vector<1x1x256xf32> to vector<1x256xf32>
    %50 = vector.shape_cast %47 : vector<1x256xf32> to vector<1x1x256xf32>
    tpu.vector_store %arg8[%c0_13, %c0_14, %c0_15], %50 {strides = array<i32>} : memref<1x4x256xf32, #tpu.memory_space<vmem>>, vector<1x1x256xf32>,
    %c1_16 = arith.constant 1 : index
    %51 = memref.load %arg4[%c1_16] : memref<16xf32, #tpu.memory_space<smem>>
    %52 = vector.broadcast %51 : f32 to vector<1x256xf32>
    %53 = arith.mulf %8, %52 : vector<1x256xf32>
    %c5 = arith.constant 5 : index
    %54 = memref.load %arg4[%c5] : memref<16xf32, #tpu.memory_space<smem>>
    %55 = vector.broadcast %54 : f32 to vector<1x256xf32>
    %56 = arith.mulf %10, %55 : vector<1x256xf32>
    %57 = arith.addf %53, %56 : vector<1x256xf32>
    %c9 = arith.constant 9 : index
    %58 = memref.load %arg4[%c9] : memref<16xf32, #tpu.memory_space<smem>>
    %59 = vector.broadcast %58 : f32 to vector<1x256xf32>
    %60 = arith.mulf %12, %59 : vector<1x256xf32>
    %61 = arith.addf %57, %60 : vector<1x256xf32>
    %c13 = arith.constant 13 : index
    %62 = memref.load %arg4[%c13] : memref<16xf32, #tpu.memory_space<smem>>
    %63 = vector.broadcast %62 : f32 to vector<1x256xf32>
    %64 = arith.mulf %14, %63 : vector<1x256xf32>
    %65 = arith.addf %61, %64 : vector<1x256xf32>
    %66 = vector.broadcast %5 : f32 to vector<1x256xf32>
    %67 = arith.mulf %65, %66 : vector<1x256xf32>
    %c4_i32_17 = arith.constant 4 : i32
    %68 = arith.muli %arg0, %c4_i32_17 : i32
    %c1_i32 = arith.constant 1 : i32
    %69 = arith.addi %68, %c1_i32 : i32
    %70 = arith.index_cast %69 : i32 to index
    %71 = memref.load %arg5[%70] : memref<8xf32, #tpu.memory_space<smem>>
    %72 = vector.broadcast %71 : f32 to vector<1x256xf32>
    %73 = arith.addf %67, %72 : vector<1x256xf32>
    %c4_i32_18 = arith.constant 4 : i32
    %74 = arith.muli %arg0, %c4_i32_18 : i32
    %c1_i32_19 = arith.constant 1 : i32
    %75 = arith.addi %74, %c1_i32_19 : i32
    %76 = arith.index_cast %75 : i32 to index
    %77 = memref.load %arg6[%76] : memref<8xf32, #tpu.memory_space<smem>>
    %78 = vector.broadcast %77 : f32 to vector<1x256xf32>
    %79 = arith.addf %67, %78 : vector<1x256xf32>
    %80 = arith.subf %79, %73 : vector<1x256xf32>
    %81 = vector.broadcast %6 : f32 to vector<1x256xf32>
    %82 = arith.mulf %80, %81 : vector<1x256xf32>
    %83 = arith.addf %73, %82 : vector<1x256xf32>
    %c0_20 = arith.constant 0 : index
    %c1_21 = arith.constant 1 : index
    %c0_22 = arith.constant 0 : index
    %84 = vector.load %arg8[%c0_20, %c1_21, %c0_22] : memref<1x4x256xf32, #tpu.memory_space<vmem>>, vector<1x1x256xf32>
    %85 = vector.shape_cast %84 : vector<1x1x256xf32> to vector<1x256xf32>
    %86 = vector.shape_cast %83 : vector<1x256xf32> to vector<1x1x256xf32>
    tpu.vector_store %arg8[%c0_20, %c1_21, %c0_22], %86 {strides = array<i32>} : memref<1x4x256xf32, #tpu.memory_space<vmem>>, vector<1x1x256xf32>,
    %c2_23 = arith.constant 2 : index
    %87 = memref.load %arg4[%c2_23] : memref<16xf32, #tpu.memory_space<smem>>
    %88 = vector.broadcast %87 : f32 to vector<1x256xf32>
    %89 = arith.mulf %8, %88 : vector<1x256xf32>
    %c6 = arith.constant 6 : index
    %90 = memref.load %arg4[%c6] : memref<16xf32, #tpu.memory_space<smem>>
    %91 = vector.broadcast %90 : f32 to vector<1x256xf32>
    %92 = arith.mulf %10, %91 : vector<1x256xf32>
    %93 = arith.addf %89, %92 : vector<1x256xf32>
    %c10 = arith.constant 10 : index
    %94 = memref.load %arg4[%c10] : memref<16xf32, #tpu.memory_space<smem>>
    %95 = vector.broadcast %94 : f32 to vector<1x256xf32>
    %96 = arith.mulf %12, %95 : vector<1x256xf32>
    %97 = arith.addf %93, %96 : vector<1x256xf32>
    %c14 = arith.constant 14 : index
    %98 = memref.load %arg4[%c14] : memref<16xf32, #tpu.memory_space<smem>>
    %99 = vector.broadcast %98 : f32 to vector<1x256xf32>
    %100 = arith.mulf %14, %99 : vector<1x256xf32>
    %101 = arith.addf %97, %100 : vector<1x256xf32>
    %102 = vector.broadcast %5 : f32 to vector<1x256xf32>
    %103 = arith.mulf %101, %102 : vector<1x256xf32>
    %c4_i32_24 = arith.constant 4 : i32
    %104 = arith.muli %arg0, %c4_i32_24 : i32
    %c2_i32 = arith.constant 2 : i32
    %105 = arith.addi %104, %c2_i32 : i32
    %106 = arith.index_cast %105 : i32 to index
    %107 = memref.load %arg5[%106] : memref<8xf32, #tpu.memory_space<smem>>
    %108 = vector.broadcast %107 : f32 to vector<1x256xf32>
    %109 = arith.addf %103, %108 : vector<1x256xf32>
    %c4_i32_25 = arith.constant 4 : i32
    %110 = arith.muli %arg0, %c4_i32_25 : i32
    %c2_i32_26 = arith.constant 2 : i32
    %111 = arith.addi %110, %c2_i32_26 : i32
    %112 = arith.index_cast %111 : i32 to index
    %113 = memref.load %arg6[%112] : memref<8xf32, #tpu.memory_space<smem>>
    %114 = vector.broadcast %113 : f32 to vector<1x256xf32>
    %115 = arith.addf %103, %114 : vector<1x256xf32>
    %116 = arith.subf %115, %109 : vector<1x256xf32>
    %117 = vector.broadcast %6 : f32 to vector<1x256xf32>
    %118 = arith.mulf %116, %117 : vector<1x256xf32>
    %119 = arith.addf %109, %118 : vector<1x256xf32>
    %c0_27 = arith.constant 0 : index
    %c2_28 = arith.constant 2 : index
    %c0_29 = arith.constant 0 : index
    %120 = vector.load %arg8[%c0_27, %c2_28, %c0_29] : memref<1x4x256xf32, #tpu.memory_space<vmem>>, vector<1x1x256xf32>
    %121 = vector.shape_cast %120 : vector<1x1x256xf32> to vector<1x256xf32>
    %122 = vector.shape_cast %119 : vector<1x256xf32> to vector<1x1x256xf32>
    tpu.vector_store %arg8[%c0_27, %c2_28, %c0_29], %122 {strides = array<i32>} : memref<1x4x256xf32, #tpu.memory_space<vmem>>, vector<1x1x256xf32>,
    %c3_30 = arith.constant 3 : index
    %123 = memref.load %arg4[%c3_30] : memref<16xf32, #tpu.memory_space<smem>>
    %124 = vector.broadcast %123 : f32 to vector<1x256xf32>
    %125 = arith.mulf %8, %124 : vector<1x256xf32>
    %c7 = arith.constant 7 : index
    %126 = memref.load %arg4[%c7] : memref<16xf32, #tpu.memory_space<smem>>
    %127 = vector.broadcast %126 : f32 to vector<1x256xf32>
    %128 = arith.mulf %10, %127 : vector<1x256xf32>
    %129 = arith.addf %125, %128 : vector<1x256xf32>
    %c11 = arith.constant 11 : index
    %130 = memref.load %arg4[%c11] : memref<16xf32, #tpu.memory_space<smem>>
    %131 = vector.broadcast %130 : f32 to vector<1x256xf32>
    %132 = arith.mulf %12, %131 : vector<1x256xf32>
    %133 = arith.addf %129, %132 : vector<1x256xf32>
    %c15 = arith.constant 15 : index
    %134 = memref.load %arg4[%c15] : memref<16xf32, #tpu.memory_space<smem>>
    %135 = vector.broadcast %134 : f32 to vector<1x256xf32>
    %136 = arith.mulf %14, %135 : vector<1x256xf32>
    %137 = arith.addf %133, %136 : vector<1x256xf32>
    %138 = vector.broadcast %5 : f32 to vector<1x256xf32>
    %139 = arith.mulf %137, %138 : vector<1x256xf32>
    %c4_i32_31 = arith.constant 4 : i32
    %140 = arith.muli %arg0, %c4_i32_31 : i32
    %c3_i32 = arith.constant 3 : i32
    %141 = arith.addi %140, %c3_i32 : i32
    %142 = arith.index_cast %141 : i32 to index
    %143 = memref.load %arg5[%142] : memref<8xf32, #tpu.memory_space<smem>>
    %144 = vector.broadcast %143 : f32 to vector<1x256xf32>
    %145 = arith.addf %139, %144 : vector<1x256xf32>
    %c4_i32_32 = arith.constant 4 : i32
    %146 = arith.muli %arg0, %c4_i32_32 : i32
    %c3_i32_33 = arith.constant 3 : i32
    %147 = arith.addi %146, %c3_i32_33 : i32
    %148 = arith.index_cast %147 : i32 to index
    %149 = memref.load %arg6[%148] : memref<8xf32, #tpu.memory_space<smem>>
    %150 = vector.broadcast %149 : f32 to vector<1x256xf32>
    %151 = arith.addf %139, %150 : vector<1x256xf32>
    %152 = arith.subf %151, %145 : vector<1x256xf32>
    %153 = vector.broadcast %6 : f32 to vector<1x256xf32>
    %154 = arith.mulf %152, %153 : vector<1x256xf32>
    %155 = arith.addf %145, %154 : vector<1x256xf32>
    %c0_34 = arith.constant 0 : index
    %c3_35 = arith.constant 3 : index
    %c0_36 = arith.constant 0 : index
    %156 = vector.load %arg8[%c0_34, %c3_35, %c0_36] : memref<1x4x256xf32, #tpu.memory_space<vmem>>, vector<1x1x256xf32>
    %157 = vector.shape_cast %156 : vector<1x1x256xf32> to vector<1x256xf32>
    %158 = vector.shape_cast %155 : vector<1x256xf32> to vector<1x1x256xf32>
    tpu.vector_store %arg8[%c0_34, %c3_35, %c0_36], %158 {strides = array<i32>} : memref<1x4x256xf32, #tpu.memory_space<vmem>>, vector<1x1x256xf32>,
    return
  }
  func.func @transform_0(%arg0: i32, %arg1: i32) -> i32 {
    %c0_i32 = arith.constant 0 : i32
    %c0_i32_0 = arith.constant 0 : i32
    return %c0_i32 : i32
  }
  func.func @transform_1(%arg0: i32, %arg1: i32) -> i32 {
    %c0_i32 = arith.constant 0 : i32
    %c0_i32_0 = arith.constant 0 : i32
    return %c0_i32 : i32
  }
  func.func @transform_2(%arg0: i32, %arg1: i32) -> i32 {
    %c0_i32 = arith.constant 0 : i32
    %c0_i32_0 = arith.constant 0 : i32
    return %c0_i32 : i32
  }
  func.func @transform_3(%arg0: i32, %arg1: i32) -> i32 {
    %c0_i32 = arith.constant 0 : i32
    %c0_i32_0 = arith.constant 0 : i32
    return %c0_i32 : i32
  }
  func.func @transform_4(%arg0: i32, %arg1: i32) -> i32 {
    %c0_i32 = arith.constant 0 : i32
    %c0_i32_0 = arith.constant 0 : i32
    return %c0_i32 : i32
  }
  func.func @transform_5(%arg0: i32, %arg1: i32) -> (i32, i32, i32) {
    %c0_i32 = arith.constant 0 : i32
    %c0_i32_0 = arith.constant 0 : i32
    return %arg0, %c0_i32, %arg1 : i32, i32, i32
  }
  func.func @transform_6(%arg0: i32, %arg1: i32) -> (i32, i32, i32) {
    %c0_i32 = arith.constant 0 : i32
    %c0_i32_0 = arith.constant 0 : i32
    return %arg0, %c0_i32, %arg1 : i32, i32, i32
  }
}

</mosaic_0001>

<llo_original>
// kernel: cfg_denoiser_forward.1
$region0: #{cfg_denoiser_forward.1}
  #allocation0 [shape = 'u32[]', space=smem, size = 0x4, offset = 0x4, fixed_abs, tag = 'smem constant byte address 0x4 - core index']
  #allocation1 [shape = 'u32[144,128]{1,0:T(1,128)}', space=vmem, size = 0x12000, scoped, tag = 'internal scratch']
  #allocation2 [shape = 'f32[1]{0:T(128)S(6)}', space=smem, size = 0x200, scoped, tag = 'scoped memory for cfg_denoiser_forward.1']
  %s0 = inlined_call_operand.vmem [shape: f32[2], index: 0, kind: input, shape index: {}]
  %s1 = inlined_call_operand.<no memory space> [shape: f32[1], index: 1, kind: input, shape index: {}]
  %s2 = inlined_call_operand.vmem [shape: f32[16], index: 2, kind: input, shape index: {}]
  %s3 = inlined_call_operand.vmem [shape: f32[8], index: 3, kind: input, shape index: {}]
  %s4 = inlined_call_operand.vmem [shape: f32[8], index: 4, kind: input, shape index: {}]
  %s5 = inlined_call_operand.vmem [shape: f32[2,4,256], index: 5, kind: input, shape index: {}]
  %s6 = inlined_call_operand.vmem [shape: f32[2,4,256], index: 6, kind: output, shape index: {}]
  %s7 = sld [smem:[#allocation0]]
  $region73: #{cfg_denoiser_forward.1} parent=0
    _
  %s9 = ssub.s32 1, %s7
  %s10 = scalar_select 0, %s9, %s7
  %11 = sst [smem:[#allocation2]] %s1
  $region1: #{cfg_denoiser_forward.1} parent=0
    #allocation3 [shape = 'u8[512]{0}', space=smem, size = 0x200, scoped, tag = 'input window, operand 0, single buffered']
    #allocation4 [shape = 's32[2]{0}', space=sflag, size = 0x8, scoped, tag = 'scoped memory for cfg_denoiser_forward.1']
    #allocation5 [shape = 'u8[512]{0}', space=smem, size = 0x200, scoped, tag = 'input window, operand 2, single buffered']
    #allocation6 [shape = 's32[1]{0}', space=sflag, size = 0x4, scoped, tag = 'scoped memory for cfg_denoiser_forward.1']
    #allocation7 [shape = 'u8[512]{0}', space=smem, size = 0x200, scoped, tag = 'input window, operand 3, single buffered']
    #allocation8 [shape = 'u8[512]{0}', space=smem, size = 0x200, scoped, tag = 'input window, operand 4, single buffered']
    #allocation9 [shape = 's32[1]{0}', space=sflag, size = 0x4, scoped, tag = 'scoped memory for cfg_denoiser_forward.1']
    %12 = vsyncpa [#allocation4], 0
    %13 = vsyncpa [#allocation6], 0
    %14 = vsyncpa [#allocation9], 0
    loop: start=0, step=1, limit=4
    $region2: #{cfg_denoiser_forward.1} parent=1 // loop_pre_header
      _
    $region3: #{cfg_denoiser_forward.1} parent=1 // loop_header
      %s16 = sphi 0, %s20
      %p17 = scmp.ge.s32.totalorder %s16, 4
      %s23 = sphi 0, %s35
      %s24 = sphi 0, %s31
      %s25 = sphi 0, %s23
      %s26 = sphi 0, %s24
      %s27 = sphi 0, %s25
      %s28 = sphi 0, %s26
      %s36 = sphi 0, %s36
      %s38 = sphi 0, %s36
      %s39 = sphi 0, %s38
      %s53 = sphi 0, %s39
      %s57 = sphi 0, %s57
      %s59 = sphi 0, %s57
      %s60 = sphi 0, %s59
      %s74 = sphi 0, %s60
      %s78 = sphi 0, %s78
      %s80 = sphi 0, %s78
      %s81 = sphi 0, %s80
      %s95 = sphi 0, %s81
      %s99 = sphi 0, %s99
      %s101 = sphi 0, %s99
      %s102 = sphi 0, %s101
      %s116 = sphi 0, %s102
      %s120 = sphi 0, %s120
      %s122 = sphi 0, %s120
      %s123 = sphi 0, %s122
      %s137 = sphi 0, %s123
      %s145 = sphi 0, %s147
      %s148 = sphi 0, %s145
      %s149 = sphi 0, %s148
      %s165 = sphi 0, %s149
      %s173 = sphi 0, %s175
      %s176 = sphi 0, %s173
      %s177 = sphi 0, %s176
      %s193 = sphi 0, %s177
    $region4: #{cfg_denoiser_forward.1} parent=1 // loop_header_branch
      %19 = sbr.rel (%p17) target = $region8
    $region5: #{cfg_denoiser_forward.1} parent=1 // loop_body
      %s21 = ssub.s32 %s16, 1
      %s22 = ssub.s32 %s16, 2
      %s29 = sadd.s32 1, %s24
      %p30 = scmp.ge.s32.totalorder %s29, 1
      %s31 = scalar_select %p30, 0, %s29
      %s32 = sadd.s32 1, %s23
      %s33 = scalar_select %p30, %s32, %s23
      %p34 = scmp.ge.s32.totalorder %s33, 2
      %s35 = scalar_select %p34, 0, %s33
      %s37 = sadd.s32 %s36, 1
      %p40 = scmp.eq.s32.totalorder %s16, 1
      %p41 = scmp.ne.s32.totalorder %s36, %s38
      %p42 = scmp.eq.s32.totalorder %s16, 0
      %p43 = por %p41, %p42
      %p44 = scmp.ne.s32.totalorder %s36, %s38
      %p45 = scmp.eq.s32.totalorder %s21, 1
      %p46 = por %p44, %p45
      %p47 = scmp.ne.s32.totalorder %s38, %s39
      %p48 = scmp.eq.s32.totalorder %s21, 0
      %p49 = por %p47, %p48
      %p50 = scmp.ne.s32.totalorder %s38, %s39
      %p51 = scmp.eq.s32.totalorder %s22, 1
      %p52 = por %p50, %p51
      %p54 = scmp.ne.s32.totalorder %s39, %s53
      %p55 = scmp.eq.s32.totalorder %s22, 0
      %p56 = por %p54, %p55
      %s58 = sadd.s32 %s57, 1
      %p61 = scmp.eq.s32.totalorder %s16, 1
      %p62 = scmp.ne.s32.totalorder %s57, %s59
      %p63 = scmp.eq.s32.totalorder %s16, 0
      %p64 = por %p62, %p63
      %p65 = scmp.ne.s32.totalorder %s57, %s59
      %p66 = scmp.eq.s32.totalorder %s21, 1
      %p67 = por %p65, %p66
      %p68 = scmp.ne.s32.totalorder %s59, %s60
      %p69 = scmp.eq.s32.totalorder %s21, 0
      %p70 = por %p68, %p69
      %p71 = scmp.ne.s32.totalorder %s59, %s60
      %p72 = scmp.eq.s32.totalorder %s22, 1
      %p73 = por %p71, %p72
      %p75 = scmp.ne.s32.totalorder %s60, %s74
      %p76 = scmp.eq.s32.totalorder %s22, 0
      %p77 = por %p75, %p76
      %s79 = sadd.s32 %s78, 1
      %p82 = scmp.eq.s32.totalorder %s16, 1
      %p83 = scmp.ne.s32.totalorder %s78, %s80
      %p84 = scmp.eq.s32.totalorder %s16, 0
      %p85 = por %p83, %p84
      %p86 = scmp.ne.s32.totalorder %s78, %s80
      %p87 = scmp.eq.s32.totalorder %s21, 1
      %p88 = por %p86, %p87
      %p89 = scmp.ne.s32.totalorder %s80, %s81
      %p90 = scmp.eq.s32.totalorder %s21, 0
      %p91 = por %p89, %p90
      %p92 = scmp.ne.s32.totalorder %s80, %s81
      %p93 = scmp.eq.s32.totalorder %s22, 1
      %p94 = por %p92, %p93
      %p96 = scmp.ne.s32.totalorder %s81, %s95
      %p97 = scmp.eq.s32.totalorder %s22, 0
      %p98 = por %p96, %p97
      %s100 = sadd.s32 %s99, 1
      %p103 = scmp.eq.s32.totalorder %s16, 1
      %p104 = scmp.ne.s32.totalorder %s99, %s101
      %p105 = scmp.eq.s32.totalorder %s16, 0
      %p106 = por %p104, %p105
      %p107 = scmp.ne.s32.totalorder %s99, %s101
      %p108 = scmp.eq.s32.totalorder %s21, 1
      %p109 = por %p107, %p108
      %p110 = scmp.ne.s32.totalorder %s101, %s102
      %p111 = scmp.eq.s32.totalorder %s21, 0
      %p112 = por %p110, %p111
      %p113 = scmp.ne.s32.totalorder %s101, %s102
      %p114 = scmp.eq.s32.totalorder %s22, 1
      %p115 = por %p113, %p114
      %p117 = scmp.ne.s32.totalorder %s102, %s116
      %p118 = scmp.eq.s32.totalorder %s22, 0
      %p119 = por %p117, %p118
      %s121 = sadd.s32 %s120, 1
      %p124 = scmp.eq.s32.totalorder %s16, 1
      %p125 = scmp.ne.s32.totalorder %s120, %s122
      %p126 = scmp.eq.s32.totalorder %s16, 0
      %p127 = por %p125, %p126
      %p128 = scmp.ne.s32.totalorder %s120, %s122
      %p129 = scmp.eq.s32.totalorder %s21, 1
      %p130 = por %p128, %p129
      %p131 = scmp.ne.s32.totalorder %s122, %s123
      %p132 = scmp.eq.s32.totalorder %s21, 0
      %p133 = por %p131, %p132
      %p134 = scmp.ne.s32.totalorder %s122, %s123
      %p135 = scmp.eq.s32.totalorder %s22, 1
      %p136 = por %p134, %p135
      %p138 = scmp.ne.s32.totalorder %s123, %s137
      %p139 = scmp.eq.s32.totalorder %s22, 0
      %p140 = por %p138, %p139
      %s141 = ssub.s32 %s23, %s35
      %s142 = ssub.s32 %s24, %s31
      %s143 = sor.u32 %s141, %s142
      %p144 = scmp.eq.s32.totalorder %s143, 0
      %s146 = sadd.s32 %s145, 1
      %s147 = scalar_select %p144, %s145, %s146
      %p150 = pneg %p144
      %p151 = scmp.eq.s32.totalorder %s16, 1
      %p152 = por %p150, %p151
      %p153 = scmp.ne.s32.totalorder %s145, %s148
      %p154 = scmp.eq.s32.totalorder %s16, 0
      %p155 = por %p153, %p154
      %p156 = scmp.ne.s32.totalorder %s145, %s148
      %p157 = scmp.eq.s32.totalorder %s21, 1
      %p158 = por %p156, %p157
      %p159 = scmp.ne.s32.totalorder %s148, %s149
      %p160 = scmp.eq.s32.totalorder %s21, 0
      %p161 = por %p159, %p160
      %p162 = scmp.ne.s32.totalorder %s148, %s149
      %p163 = scmp.eq.s32.totalorder %s22, 1
      %p164 = por %p162, %p163
      %p166 = scmp.ne.s32.totalorder %s149, %s165
      %p167 = scmp.eq.s32.totalorder %s22, 0
      %p168 = por %p166, %p167
      %s169 = ssub.s32 %s23, %s35
      %s170 = ssub.s32 %s24, %s31
      %s171 = sor.u32 %s169, %s170
      %p172 = scmp.eq.s32.totalorder %s171, 0
      %s174 = sadd.s32 %s173, 1
      %s175 = scalar_select %p172, %s173, %s174
      %p178 = pneg %p172
      %p179 = scmp.eq.s32.totalorder %s16, 1
      %p180 = por %p178, %p179
      %p181 = scmp.ne.s32.totalorder %s173, %s176
      %p182 = scmp.eq.s32.totalorder %s16, 0
      %p183 = por %p181, %p182
      %p184 = scmp.ne.s32.totalorder %s173, %s176
      %p185 = scmp.eq.s32.totalorder %s21, 1
      %p186 = por %p184, %p185
      %p187 = scmp.ne.s32.totalorder %s176, %s177
      %p188 = scmp.eq.s32.totalorder %s21, 0
      %p189 = por %p187, %p188
      %p190 = scmp.ne.s32.totalorder %s176, %s177
      %p191 = scmp.eq.s32.totalorder %s22, 1
      %p192 = por %p190, %p191
      %p194 = scmp.ne.s32.totalorder %s177, %s193
      %p195 = scmp.eq.s32.totalorder %s22, 0
      %p196 = por %p194, %p195
      %p197 = scmp.le.s32.totalorder 1, %s16
      %p198 = scmp.lt.s32.totalorder %s16, 3
      %p199 = pnand %p197, %p198
      %p200 = pneg %p199
      // Predicated region
      $region9: #{cfg_denoiser_forward.1} parent=5 // pred_check
        _
      $region10: #{cfg_denoiser_forward.1} parent=5 // pred_check_branch
        %202 = sbr.rel (%p199) target = $region12
      $region11: #{cfg_denoiser_forward.1} parent=5 // pred_region
        %s203 = ssub.s32 %s16, 1
        // Predicated region
        $region13: #{cfg_denoiser_forward.1} parent=11 // pred_check
          %p204 = pneg %p49
        $region14: #{cfg_denoiser_forward.1} parent=11 // pred_check_branch
          %206 = sbr.rel (%p204) target = $region16
        $region15: #{cfg_denoiser_forward.1} parent=11 // pred_region
          %s208 = ssub.s32 16, 16
          %209 = vsyncadd [#allocation4], %s208
          %s211 = sshll.u32 %s0, 4
          %s212 = int_to_ptr.vmem [resolvable:$true] %s211
          %214 = dma.vmem_to_smem %s212, 16, [#allocation3], [#allocation4]
        $region16: #{cfg_denoiser_forward.1} parent=11 // pred_fallthru
          _
        // Predicated region
        $region17: #{cfg_denoiser_forward.1} parent=11 // pred_check
          %p215 = pneg %p70
        $region18: #{cfg_denoiser_forward.1} parent=11 // pred_check_branch
          %217 = sbr.rel (%p215) target = $region20
        $region19: #{cfg_denoiser_forward.1} parent=11 // pred_region
          _
        $region20: #{cfg_denoiser_forward.1} parent=11 // pred_fallthru
          _
        // Predicated region
        $region21: #{cfg_denoiser_forward.1} parent=11 // pred_check
          %p218 = pneg %p91
        $region22: #{cfg_denoiser_forward.1} parent=11 // pred_check_branch
          %220 = sbr.rel (%p218) target = $region24
        $region23: #{cfg_denoiser_forward.1} parent=11 // pred_region
          %s222 = ssub.s32 16, 16
          %223 = vsyncadd [#allocation6], %s222
          %s225 = sshll.u32 %s2, 4
          %s226 = int_to_ptr.vmem [resolvable:$true] %s225
          %228 = dma.vmem_to_smem %s226, 16, [#allocation5], [#allocation6]
        $region24: #{cfg_denoiser_forward.1} parent=11 // pred_fallthru
          _
        // Predicated region
        $region25: #{cfg_denoiser_forward.1} parent=11 // pred_check
          %p229 = pneg %p112
        $region26: #{cfg_denoiser_forward.1} parent=11 // pred_check_branch
          %231 = sbr.rel (%p229) target = $region28
        $region27: #{cfg_denoiser_forward.1} parent=11 // pred_region
          %s233 = ssub.s32 16, 16
          %234 = vsyncadd [#allocation6], %s233
          %s236 = sshll.u32 %s3, 4
          %s237 = int_to_ptr.vmem [resolvable:$true] %s236
          %239 = dma.vmem_to_smem %s237, 16, [#allocation7], [#allocation6]
        $region28: #{cfg_denoiser_forward.1} parent=11 // pred_fallthru
          _
        // Predicated region
        $region29: #{cfg_denoiser_forward.1} parent=11 // pred_check
          %p240 = pneg %p133
        $region30: #{cfg_denoiser_forward.1} parent=11 // pred_check_branch
          %242 = sbr.rel (%p240) target = $region32
        $region31: #{cfg_denoiser_forward.1} parent=11 // pred_region
          %s244 = ssub.s32 16, 16
          %245 = vsyncadd [#allocation9], %s244
          %s247 = sshll.u32 %s4, 4
          %s248 = int_to_ptr.vmem [resolvable:$true] %s247
          %250 = dma.vmem_to_smem %s248, 16, [#allocation8], [#allocation9]
        $region32: #{cfg_denoiser_forward.1} parent=11 // pred_fallthru
          _
      $region12: #{cfg_denoiser_forward.1} parent=5 // pred_fallthru
        _
      %p251 = scmp.lt.s32.totalorder %s16, 2
      // Predicated region
      $region33: #{cfg_denoiser_forward.1} parent=5 // pred_check
        %p252 = pneg %p251
      $region34: #{cfg_denoiser_forward.1} parent=5 // pred_check_branch
        %254 = sbr.rel (%p252) target = $region36
      $region35: #{cfg_denoiser_forward.1} parent=5 // pred_region
        // Predicated region
        $region37: #{cfg_denoiser_forward.1} parent=35 // pred_check
          %p255 = pneg %p155
        $region38: #{cfg_denoiser_forward.1} parent=35 // pred_check_branch
          %257 = sbr.rel (%p255) target = $region40
        $region39: #{cfg_denoiser_forward.1} parent=35 // pred_region
          %s258 = smul.u32 2, %s24
          %p259 = scmp.lt.s32.totalorder %s23, 1
          %s260 = scalar_select %p259, %s23, 1
          %p261 = scmp.lt.s32.totalorder %s258, 1
          %s262 = scalar_select %p261, %s258, 1
          %s263 = smul.addr %s260, 2
          %s264 = sadd.s32 %s262, %s263
          %s265 = smul.addr %s264, 4
          %s266 = scalar_lea.vmem %s5, %s265
          %s267 = smul.u32 2, %s24
        $region40: #{cfg_denoiser_forward.1} parent=35 // pred_fallthru
          _
      $region36: #{cfg_denoiser_forward.1} parent=5 // pred_fallthru
        _
      %p268 = scmp.le.s32.totalorder 1, %s16
      %p269 = scmp.lt.s32.totalorder %s16, 3
      %p270 = pnand %p268, %p269
      %p271 = pneg %p270
      // Predicated region
      $region41: #{cfg_denoiser_forward.1} parent=5 // pred_check
        _
      $region42: #{cfg_denoiser_forward.1} parent=5 // pred_check_branch
        %273 = sbr.rel (%p270) target = $region44
      $region43: #{cfg_denoiser_forward.1} parent=5 // pred_region
        %s274 = ssub.s32 %s16, 1
        // Predicated region
        $region45: #{cfg_denoiser_forward.1} parent=43 // pred_check
          %p275 = pneg %p49
        $region46: #{cfg_denoiser_forward.1} parent=43 // pred_check_branch
          %277 = sbr.rel (%p275) target = $region48
        $region47: #{cfg_denoiser_forward.1} parent=43 // pred_region
          %278 = dma.done [#allocation4], 16
        $region48: #{cfg_denoiser_forward.1} parent=43 // pred_fallthru
          _
        // Predicated region
        $region49: #{cfg_denoiser_forward.1} parent=43 // pred_check
          %p279 = pneg %p91
        $region50: #{cfg_denoiser_forward.1} parent=43 // pred_check_branch
          %281 = sbr.rel (%p279) target = $region52
        $region51: #{cfg_denoiser_forward.1} parent=43 // pred_region
          %282 = dma.done [#allocation6], 16
        $region52: #{cfg_denoiser_forward.1} parent=43 // pred_fallthru
          _
        // Predicated region
        $region53: #{cfg_denoiser_forward.1} parent=43 // pred_check
          %p283 = pneg %p112
        $region54: #{cfg_denoiser_forward.1} parent=43 // pred_check_branch
          %285 = sbr.rel (%p283) target = $region56
        $region55: #{cfg_denoiser_forward.1} parent=43 // pred_region
          %286 = dma.done [#allocation6], 16
        $region56: #{cfg_denoiser_forward.1} parent=43 // pred_fallthru
          _
        // Predicated region
        $region57: #{cfg_denoiser_forward.1} parent=43 // pred_check
          %p287 = pneg %p133
        $region58: #{cfg_denoiser_forward.1} parent=43 // pred_check_branch
          %289 = sbr.rel (%p287) target = $region60
        $region59: #{cfg_denoiser_forward.1} parent=43 // pred_region
          %290 = dma.done [#allocation9], 16
        $region60: #{cfg_denoiser_forward.1} parent=43 // pred_fallthru
          _
        %291 = sfence
        %p292 = pneg %p49
        %p293 = pneg %p46
        %p294 = pneg %p70
        %p295 = pneg %p67
        %p296 = pneg %p91
        %p297 = pneg %p88
        %p298 = pneg %p112
        %p299 = pneg %p109
        %p300 = pneg %p133
        %p301 = pneg %p130
        %s302 = smul.u32 2, %s26
        %p303 = scmp.lt.s32.totalorder %s25, 1
        %s304 = scalar_select %p303, %s25, 1
        %p305 = scmp.lt.s32.totalorder %s302, 1
        %s306 = scalar_select %p305, %s302, 1
        %s307 = smul.addr %s304, 2
        %s308 = sadd.s32 %s306, %s307
        %s309 = smul.addr %s308, 4
        %s310 = scalar_lea.vmem %s5, %s309
        %p311 = pneg %p161
        %p312 = pneg %p158
        %p313 = pneg %p189
        %p314 = pneg %p186
        %s315 = smul.u32 2, %s26
        %p316 = scmp.lt.s32.totalorder %s25, 1
        %s317 = scalar_select %p316, %s25, 1
        %p318 = scmp.lt.s32.totalorder %s315, 1
        %s319 = scalar_select %p318, %s315, 1
        %s320 = smul.addr %s317, 2
        %s321 = sadd.s32 %s319, %s320
        %s322 = smul.addr %s321, 4
        %s323 = scalar_lea.vmem %s6, %s322
        %s324 = smul.u32 2, %s26
        %p325 = scmp.lt.s32.totalorder %s25, 1
        %s326 = scalar_select %p325, %s25, 1
        %p327 = scmp.lt.s32.totalorder %s324, 1
        %s328 = scalar_select %p327, %s324, 1
        %s329 = smul.addr %s326, 2
        %s330 = sadd.s32 %s328, %s329
        %s331 = smul.addr %s330, 4
        %s332 = scalar_lea.vmem %s5, %s331
        %s333 = smul.u32 2, %s26
        %s334 = smul.u32 2, %s26
        %p335 = scmp.lt.s32.totalorder %s25, 1
        %s336 = scalar_select %p335, %s25, 1
        %p337 = scmp.lt.s32.totalorder %s334, 1
        %s338 = scalar_select %p337, %s334, 1
        %s339 = smul.addr %s336, 2
        %s340 = sadd.s32 %s338, %s339
        %s341 = smul.addr %s340, 4
        %s342 = scalar_lea.vmem %s6, %s341
        %s343 = smul.u32 2, %s26
        %s344 = sld [smem:[#allocation3 + %s25]]
        %s345 = smul.f32 %s344, %s344
        %s346 = sadd.f32 %s345, 1.0
        %v347 = vstv %s346
        %v348 = vrsqrt.pop %v347
        %v349 = vmul.f32 %v347, %v348
        %vm350 = vcmp.eq.f32.partialorder %v347, inf
        %v351 = vsel %vm350, %v347, %v349
        %vm352 = vcmp.eq.f32.partialorder %v347, 0.0
        %v353 = vand.u32 %v347, 2147483648
        %v354 = vsel %vm352, %v353, %v351
        %s355 = vtos %v354
        %v356 = vstv %s355
        %v357 = vrcp.pop %v356
        %s358 = vtos %v357
        %s359 = sld [smem:[#allocation2]]
        %v360 = vld [vmem:[%s332] ss:$4 sm:$0x3]
        %s361 = scalar_lea.vmem %s332, 1
        %v362 = vld [vmem:[%s361] ss:$4 sm:$0x3]
        %s363 = scalar_lea.vmem %s332, 2
        %v364 = vld [vmem:[%s363] ss:$4 sm:$0x3]
        %s365 = scalar_lea.vmem %s332, 3
        %v366 = vld [vmem:[%s365] ss:$4 sm:$0x3]
        %s367 = sld [smem:[#allocation5]]
        %v368 = vstv %s367
        %v369 = vmul.f32 %v360, %v368
        %s370 = sld [smem:[#allocation5 + $0x4]]
        %v371 = vstv %s370
        %v372 = vmul.f32 %v362, %v371
        %v373 = vadd.f32 %v369, %v372
        %s374 = sld [smem:[#allocation5 + $0x8]]
        %v375 = vstv %s374
        %v376 = vmul.f32 %v364, %v375
        %v377 = vadd.f32 %v373, %v376
        %s378 = sld [smem:[#allocation5 + $0xc]]
        %v379 = vstv %s378
        %v380 = vmul.f32 %v366, %v379
        %v381 = vadd.f32 %v377, %v380
        %v382 = vstv %s358
        %v383 = vmul.f32 %v381, %v382
        %s384 = smul.u32 %s25, 4
        %s385 = sld [smem:[#allocation7 + %s384]]
        %v386 = vstv %s385
        %v387 = vadd.f32 %v383, %v386
        %s388 = sld [smem:[#allocation8 + %s384]]
        %v389 = vstv %s388
        %v390 = vadd.f32 %v383, %v389
        %v391 = vsub.f32 %v390, %v387
        %v392 = vstv %s359
        %v393 = vmul.f32 %v391, %v392
        %v394 = vadd.f32 %v387, %v393
        %v395 = vlaneseq
        %vm396 = vcmp.ge.s32.totalorder %v395, 0
        %vm397 = vcmp.lt.s32.totalorder %v395, 256
        %vm398 = vmand %vm396, %vm397
        %399 = vst.msk [vmem:[%s342] ss:$4 sm:$0x3] %vm398, %v394
        %s400 = sld [smem:[#allocation5 + $0x1]]
        %v401 = vstv %s400
        %v402 = vmul.f32 %v360, %v401
        %s403 = sld [smem:[#allocation5 + $0x5]]
        %v404 = vstv %s403
        %v405 = vmul.f32 %v362, %v404
        %v406 = vadd.f32 %v402, %v405
        %s407 = sld [smem:[#allocation5 + $0x9]]
        %v408 = vstv %s407
        %v409 = vmul.f32 %v364, %v408
        %v410 = vadd.f32 %v406, %v409
        %s411 = sld [smem:[#allocation5 + $0xd]]
        %v412 = vstv %s411
        %v413 = vmul.f32 %v366, %v412
        %v414 = vadd.f32 %v410, %v413
        %v415 = vmul.f32 %v414, %v382
        %s416 = sadd.s32 %s384, 1
        %s417 = sld [smem:[#allocation7 + %s416]]
        %v418 = vstv %s417
        %v419 = vadd.f32 %v415, %v418
        %s420 = sld [smem:[#allocation8 + %s416]]
        %v421 = vstv %s420
        %v422 = vadd.f32 %v415, %v421
        %v423 = vsub.f32 %v422, %v419
        %v424 = vmul.f32 %v423, %v392
        %v425 = vadd.f32 %v419, %v424
        %s426 = scalar_lea.vmem %s342, 1
        %427 = vst.msk [vmem:[%s426] ss:$4 sm:$0x3] %vm398, %v425
        %s428 = sld [smem:[#allocation5 + $0x2]]
        %v429 = vstv %s428
        %v430 = vmul.f32 %v360, %v429
        %s431 = sld [smem:[#allocation5 + $0x6]]
        %v432 = vstv %s431
        %v433 = vmul.f32 %v362, %v432
        %v434 = vadd.f32 %v430, %v433
        %s435 = sld [smem:[#allocation5 + $0xa]]
        %v436 = vstv %s435
        %v437 = vmul.f32 %v364, %v436
        %v438 = vadd.f32 %v434, %v437
        %s439 = sld [smem:[#allocation5 + $0xe]]
        %v440 = vstv %s439
        %v441 = vmul.f32 %v366, %v440
        %v442 = vadd.f32 %v438, %v441
        %v443 = vmul.f32 %v442, %v382
        %s444 = sadd.s32 %s384, 2
        %s445 = sld [smem:[#allocation7 + %s444]]
        %v446 = vstv %s445
        %v447 = vadd.f32 %v443, %v446
        %s448 = sld [smem:[#allocation8 + %s444]]
        %v449 = vstv %s448
        %v450 = vadd.f32 %v443, %v449
        %v451 = vsub.f32 %v450, %v447
        %v452 = vmul.f32 %v451, %v392
        %v453 = vadd.f32 %v447, %v452
        %s454 = scalar_lea.vmem %s342, 2
        %455 = vst.msk [vmem:[%s454] ss:$4 sm:$0x3] %vm398, %v453
        %s456 = sld [smem:[#allocation5 + $0x3]]
        %v457 = vstv %s456
        %v458 = vmul.f32 %v360, %v457
        %s459 = sld [smem:[#allocation5 + $0x7]]
        %v460 = vstv %s459
        %v461 = vmul.f32 %v362, %v460
        %v462 = vadd.f32 %v458, %v461
        %s463 = sld [smem:[#allocation5 + $0xb]]
        %v464 = vstv %s463
        %v465 = vmul.f32 %v364, %v464
        %v466 = vadd.f32 %v462, %v465
        %s467 = sld [smem:[#allocation5 + $0xf]]
        %v468 = vstv %s467
        %v469 = vmul.f32 %v366, %v468
        %v470 = vadd.f32 %v466, %v469
        %v471 = vmul.f32 %v470, %v382
        %s472 = sadd.s32 %s384, 3
        %s473 = sld [smem:[#allocation7 + %s472]]
        %v474 = vstv %s473
        %v475 = vadd.f32 %v471, %v474
        %s476 = sld [smem:[#allocation8 + %s472]]
        %v477 = vstv %s476
        %v478 = vadd.f32 %v471, %v477
        %v479 = vsub.f32 %v478, %v475
        %v480 = vmul.f32 %v479, %v392
        %v481 = vadd.f32 %v475, %v480
        %s482 = scalar_lea.vmem %s342, 3
        %483 = vst.msk [vmem:[%s482] ss:$4 sm:$0x3] %vm398, %v481
        %s484 = smul.u32 2, %s26
        %p485 = scmp.lt.s32.totalorder %s25, 1
        %s486 = scalar_select %p485, %s25, 1
        %p487 = scmp.lt.s32.totalorder %s484, 1
        %s488 = scalar_select %p487, %s484, 1
        %s489 = smul.addr %s486, 2
        %s490 = sadd.s32 %s488, %s489
        %s491 = smul.addr %s490, 4
        %s492 = scalar_lea.vmem %s6, %s491
        // Predicated region
        $region61: #{cfg_denoiser_forward.1} parent=43 // pred_check
          %p493 = pneg %p186
        $region62: #{cfg_denoiser_forward.1} parent=43 // pred_check_branch
          %495 = sbr.rel (%p493) target = $region64
        $region63: #{cfg_denoiser_forward.1} parent=43 // pred_region
          %s496 = smul.u32 2, %s26
        $region64: #{cfg_denoiser_forward.1} parent=43 // pred_fallthru
          _
      $region44: #{cfg_denoiser_forward.1} parent=5 // pred_fallthru
        _
      %p497 = scmp.le.s32.totalorder 2, %s16
      // Predicated region
      $region65: #{cfg_denoiser_forward.1} parent=5 // pred_check
        %p498 = pneg %p497
      $region66: #{cfg_denoiser_forward.1} parent=5 // pred_check_branch
        %500 = sbr.rel (%p498) target = $region68
      $region67: #{cfg_denoiser_forward.1} parent=5 // pred_region
        %s501 = ssub.s32 %s16, 2
        // Predicated region
        $region69: #{cfg_denoiser_forward.1} parent=67 // pred_check
          %p502 = pneg %p192
        $region70: #{cfg_denoiser_forward.1} parent=67 // pred_check_branch
          %504 = sbr.rel (%p502) target = $region72
        $region71: #{cfg_denoiser_forward.1} parent=67 // pred_region
          %s505 = smul.u32 2, %s28
          %p506 = scmp.lt.s32.totalorder %s27, 1
          %s507 = scalar_select %p506, %s27, 1
          %p508 = scmp.lt.s32.totalorder %s505, 1
          %s509 = scalar_select %p508, %s505, 1
          %s510 = smul.addr %s507, 2
          %s511 = sadd.s32 %s509, %s510
          %s512 = smul.addr %s511, 4
          %s513 = scalar_lea.vmem %s6, %s512
        $region72: #{cfg_denoiser_forward.1} parent=67 // pred_fallthru
          _
      $region68: #{cfg_denoiser_forward.1} parent=5 // pred_fallthru
        _
    $region6: #{cfg_denoiser_forward.1} parent=1 // loop_footer
      %s20 = sadd.s32 1, %s16
    $region7: #{cfg_denoiser_forward.1} parent=1 // loop_footer_branch
      %15 = sbr.rel target = $region3
    $region8: #{cfg_denoiser_forward.1} parent=1 // loop_exit
      _
    %514 = vsyncpa [#allocation4], 1
    %s515 = scalar_lea.sflag [#allocation4], 1
    %516 = vsyncpa %s515, 1
    %517 = vsyncpa [#allocation6], 1
    %518 = vsyncpa [#allocation9], 1

</llo_original>
